<compile_context>
chip_gen: v6e
topology: v6e:2x2x1
jax: 0.10.0
libtpu: 0.0.40
codegen_flags: <defaults>
</compile_context>

<pallas_src>
import jax
import jax.numpy as jnp
from jax.experimental import pallas as pl
from jax.experimental.pallas import tpu as pltpu

_BN_EPS = 1e-5
_LANE = 128
_SUBLANE = 8


def _round_up(n, m):
    return ((n + m - 1) // m) * m


def _make_fused_mlp_kernel(n_hidden):
    """Kernel args: x_ref, (w_i, packed_i)*n_hidden, w_out, b_out, o_ref."""

    def kernel(*refs):
        x_ref = refs[0]
        o_ref = refs[-1]
        h = x_ref[...]
        idx = 1
        for _ in range(n_hidden):
            w_ref, pkd_ref = refs[idx], refs[idx + 1]
            idx += 2
            pkd = pkd_ref[...]                      # (8, Hp): rows 0/1/2 = b/scale/shift
            z = jnp.dot(h, w_ref[...], preferred_element_type=jnp.float32)
            z = z + pkd[0:1, :]                     # bias
            z = jnp.maximum(z, 0.0)                 # ReLU
            h = z * pkd[1:2, :] + pkd[2:3, :]       # BatchNorm1d (eval) folded
            # TODO(synk): training-mode Dropout(p=0.2) RNG mask omitted (eval identity).
        w_ref, b_ref = refs[idx], refs[idx + 1]
        z = jnp.dot(h, w_ref[...], preferred_element_type=jnp.float32) + b_ref[...]
        o_ref[...] = jax.nn.sigmoid(z).astype(o_ref.dtype)

    return kernel


def _prepare_params(params):
    """Pad to (8,128)-friendly shapes and fold BN into scale/shift (done once)."""
    prepared = []
    for p in params[:-1]:
        din, h = p["w"].shape
        dinp, hp = _round_up(din, _LANE), _round_up(h, _LANE)
        w = jnp.zeros((dinp, hp), jnp.float32).at[:din, :h].set(p["w"])
        scale = p["gamma"] * jax.lax.rsqrt(p["var"] + _BN_EPS)
        shift = p["beta"] - p["mean"] * scale
        packed = jnp.zeros((_SUBLANE, hp), jnp.float32)
        packed = packed.at[0, :h].set(p["b"])
        packed = packed.at[1, :h].set(scale)
        packed = packed.at[2, :h].set(shift)
        prepared.append((w, packed))
    p = params[-1]
    din, o = p["w"].shape
    dinp, op_ = _round_up(din, _LANE), _round_up(o, _LANE)
    w = jnp.zeros((dinp, op_), jnp.float32).at[:din, :o].set(p["w"])
    b = jnp.zeros((1, op_), jnp.float32).at[0, :o].set(p["b"])
    prepared.append((w, b))
    return prepared


def mlp_forward(x, params, *, batch_tile=256):
    n_hidden = len(params) - 1
    output_dim = params[-1]["w"].shape[1]
    prepared = _prepare_params(params)

    B, din = x.shape
    dinp = prepared[0][0].shape[0]
    outp = prepared[-1][0].shape[1]          # lane-dense (>=128) head width

    # Batch padding / tiling: small batches -> single tile; large batches ->
    # tile rows so the "parallel" grid axis can shard across TensorCores.
    if B <= batch_tile:
        bp = _round_up(B, _SUBLANE)
        tile_b = bp
    else:
        bp = _round_up(B, batch_tile)
        tile_b = batch_tile
    x_pad = jnp.zeros((bp, dinp), jnp.float32).at[:B, :din].set(x)

    in_specs = [pl.BlockSpec((tile_b, dinp), lambda i: (i, 0))]
    flat_args = [x_pad]
    for arrs in prepared:
        for a in arrs:
            in_specs.append(pl.BlockSpec(a.shape, lambda i: (0, 0)))
            flat_args.append(a)

    out = pl.pallas_call(
        _make_fused_mlp_kernel(n_hidden),
        grid=(bp // tile_b,),
        in_specs=in_specs,
        out_specs=pl.BlockSpec((tile_b, outp), lambda i: (i, 0)),
        out_shape=jax.ShapeDtypeStruct((bp, outp), jnp.float32),
        compiler_params=pltpu.CompilerParams(
            dimension_semantics=("parallel",)),
    )(*flat_args)

    return out[:B, :output_dim]


def init_mlp_params(key, input_dim, hidden_dims, output_dim=1):
    """Deterministic init mimicking nn.Linear's U(-1/sqrt(fan_in), 1/sqrt(fan_in));
    BatchNorm1d at its fresh-module defaults (gamma=1, beta=0, mean=0, var=1)."""
    params = []
    prev = input_dim
    for h in hidden_dims:
        key, kw, kb = jax.random.split(key, 3)
        bound = 1.0 / float(prev) ** 0.5
        params.append(dict(
            w=jax.random.uniform(kw, (prev, h), jnp.float32, -bound, bound),
            b=jax.random.uniform(kb, (h,), jnp.float32, -bound, bound),
            gamma=jnp.ones((h,), jnp.float32),
            beta=jnp.zeros((h,), jnp.float32),
            mean=jnp.zeros((h,), jnp.float32),
            var=jnp.ones((h,), jnp.float32),
        ))
        prev = h
    key, kw, kb = jax.random.split(key, 3)
    bound = 1.0 / float(prev) ** 0.5
    params.append(dict(
        w=jax.random.uniform(kw, (prev, output_dim), jnp.float32, -bound, bound),
        b=jax.random.uniform(kb, (output_dim,), jnp.float32, -bound, bound),
    ))
    return params


if __name__ == "__main__":
    key = jax.random.PRNGKey(0)
    key, kx = jax.random.split(key)

    batch, input_dim, hidden_dims, output_dim = 8, 32, (64, 32), 1
    x = jax.random.normal(kx, (batch, input_dim), dtype=jnp.float32)
    params = init_mlp_params(key, input_dim, hidden_dims, output_dim)

    fwd = jax.jit(mlp_forward)
    out = jax.block_until_ready(fwd(x, params))

    # Reference check in plain JAX (same eval-mode semantics).
    ref = x
    for p in params[:-1]:
        h = jnp.maximum(ref @ p["w"] + p["b"], 0.0)
        ref = (h - p["mean"]) / jnp.sqrt(p["var"] + _BN_EPS) * p["gamma"] + p["beta"]
    ref = jax.nn.sigmoid(ref @ params[-1]["w"] + params[-1]["b"])

    assert out.shape == (batch, output_dim)
    assert bool(jnp.all(jnp.isfinite(out)))
    assert jnp.allclose(out, ref, atol=1e-5, rtol=1e-5)
    print("KERNEL_OK")
</pallas_src>

<mosaic_0001>
module attributes {stable_mosaic.version = 11 : i64} {
  func.func @kernel(%arg0: i32, %arg1: memref<8x128xf32, #tpu.memory_space<vmem>>, %arg2: memref<128x128xf32, #tpu.memory_space<vmem>>, %arg3: memref<8x128xf32, #tpu.memory_space<vmem>>, %arg4: memref<128x128xf32, #tpu.memory_space<vmem>>, %arg5: memref<8x128xf32, #tpu.memory_space<vmem>>, %arg6: memref<128x128xf32, #tpu.memory_space<vmem>>, %arg7: memref<1x128xf32, #tpu.memory_space<vmem>>, %arg8: memref<8x128xf32, #tpu.memory_space<vmem>>) attributes {dimension_semantics = [#tpu.dimension_semantics<parallel>], iteration_bounds = array<i64: 1>, scalar_prefetch = 0 : i64, scratch_operands = 0 : i64, tpu.core_type = #tpu.core_type<tc>, window_params = [{transform_indices = @transform_0, window_bounds = array<i64: 8, 128>}, {pipeline_mode = #tpu.pipeline_mode<synchronous>, transform_indices = @transform_1, window_bounds = array<i64: 128, 128>}, {pipeline_mode = #tpu.pipeline_mode<synchronous>, transform_indices = @transform_2, window_bounds = array<i64: 8, 128>}, {pipeline_mode = #tpu.pipeline_mode<synchronous>, transform_indices = @transform_3, window_bounds = array<i64: 128, 128>}, {pipeline_mode = #tpu.pipeline_mode<synchronous>, transform_indices = @transform_4, window_bounds = array<i64: 8, 128>}, {pipeline_mode = #tpu.pipeline_mode<synchronous>, transform_indices = @transform_5, window_bounds = array<i64: 128, 128>}, {pipeline_mode = #tpu.pipeline_mode<synchronous>, transform_indices = @transform_6, window_bounds = array<i64: 1, 128>}, {transform_indices = @transform_7, window_bounds = array<i64: 8, 128>}]} {
    %c0 = arith.constant 0 : index
    %c0_0 = arith.constant 0 : index
    %0 = vector.load %arg1[%c0, %c0_0] : memref<8x128xf32, #tpu.memory_space<vmem>>, vector<8x128xf32>
    %c0_1 = arith.constant 0 : index
    %c0_2 = arith.constant 0 : index
    %1 = vector.load %arg3[%c0_1, %c0_2] : memref<8x128xf32, #tpu.memory_space<vmem>>, vector<8x128xf32>
    %c0_3 = arith.constant 0 : index
    %c0_4 = arith.constant 0 : index
    %2 = vector.load %arg2[%c0_3, %c0_4] : memref<128x128xf32, #tpu.memory_space<vmem>>, vector<128x128xf32>
    %cst = arith.constant dense<0.000000e+00> : vector<8x128xf32>
    %3 = tpu.matmul %0, %2, %cst {dimension_numbers = #tpu.dot_dimension_numbers<[1], [0], [0], [1], [0, 0, 1, 1], [], []>} : vector<8x128xf32>, vector<128x128xf32>, vector<8x128xf32> -> vector<8x128xf32>
    %4 = vector.extract_strided_slice %1 {offsets = [0, 0], sizes = [1, 128], strides = [1, 1]} : vector<8x128xf32> to vector<1x128xf32>
    %5 = vector.broadcast %4 : vector<1x128xf32> to vector<8x128xf32>
    %6 = arith.addf %3, %5 : vector<8x128xf32>
    %cst_5 = arith.constant 0.000000e+00 : f32
    %7 = vector.broadcast %cst_5 : f32 to vector<8x128xf32>
    %8 = arith.maximumf %6, %7 : vector<8x128xf32>
    %9 = vector.extract_strided_slice %1 {offsets = [1, 0], sizes = [1, 128], strides = [1, 1]} : vector<8x128xf32> to vector<1x128xf32>
    %10 = vector.broadcast %9 : vector<1x128xf32> to vector<8x128xf32>
    %11 = arith.mulf %8, %10 : vector<8x128xf32>
    %12 = vector.extract_strided_slice %1 {offsets = [2, 0], sizes = [1, 128], strides = [1, 1]} : vector<8x128xf32> to vector<1x128xf32>
    %13 = vector.broadcast %12 : vector<1x128xf32> to vector<8x128xf32>
    %14 = arith.addf %11, %13 : vector<8x128xf32>
    %c0_6 = arith.constant 0 : index
    %c0_7 = arith.constant 0 : index
    %15 = vector.load %arg5[%c0_6, %c0_7] : memref<8x128xf32, #tpu.memory_space<vmem>>, vector<8x128xf32>
    %c0_8 = arith.constant 0 : index
    %c0_9 = arith.constant 0 : index
    %16 = vector.load %arg4[%c0_8, %c0_9] : memref<128x128xf32, #tpu.memory_space<vmem>>, vector<128x128xf32>
    %cst_10 = arith.constant dense<0.000000e+00> : vector<8x128xf32>
    %17 = tpu.matmul %14, %16, %cst_10 {dimension_numbers = #tpu.dot_dimension_numbers<[1], [0], [0], [1], [0, 0, 1, 1], [], []>} : vector<8x128xf32>, vector<128x128xf32>, vector<8x128xf32> -> vector<8x128xf32>
    %18 = vector.extract_strided_slice %15 {offsets = [0, 0], sizes = [1, 128], strides = [1, 1]} : vector<8x128xf32> to vector<1x128xf32>
    %19 = vector.broadcast %18 : vector<1x128xf32> to vector<8x128xf32>
    %20 = arith.addf %17, %19 : vector<8x128xf32>
    %cst_11 = arith.constant 0.000000e+00 : f32
    %21 = vector.broadcast %cst_11 : f32 to vector<8x128xf32>
    %22 = arith.maximumf %20, %21 : vector<8x128xf32>
    %23 = vector.extract_strided_slice %15 {offsets = [1, 0], sizes = [1, 128], strides = [1, 1]} : vector<8x128xf32> to vector<1x128xf32>
    %24 = vector.broadcast %23 : vector<1x128xf32> to vector<8x128xf32>
    %25 = arith.mulf %22, %24 : vector<8x128xf32>
    %26 = vector.extract_strided_slice %15 {offsets = [2, 0], sizes = [1, 128], strides = [1, 1]} : vector<8x128xf32> to vector<1x128xf32>
    %27 = vector.broadcast %26 : vector<1x128xf32> to vector<8x128xf32>
    %28 = arith.addf %25, %27 : vector<8x128xf32>
    %c0_12 = arith.constant 0 : index
    %c0_13 = arith.constant 0 : index
    %29 = vector.load %arg6[%c0_12, %c0_13] : memref<128x128xf32, #tpu.memory_space<vmem>>, vector<128x128xf32>
    %cst_14 = arith.constant dense<0.000000e+00> : vector<8x128xf32>
    %30 = tpu.matmul %28, %29, %cst_14 {dimension_numbers = #tpu.dot_dimension_numbers<[1], [0], [0], [1], [0, 0, 1, 1], [], []>} : vector<8x128xf32>, vector<128x128xf32>, vector<8x128xf32> -> vector<8x128xf32>
    %c0_15 = arith.constant 0 : index
    %c0_16 = arith.constant 0 : index
    %31 = vector.load %arg7[%c0_15, %c0_16] : memref<1x128xf32, #tpu.memory_space<vmem>>, vector<1x128xf32>
    %32 = vector.broadcast %31 : vector<1x128xf32> to vector<8x128xf32>
    %33 = arith.addf %30, %32 : vector<8x128xf32>
    %34 = arith.negf %33 : vector<8x128xf32>
    %35 = math.exp %34 : vector<8x128xf32>
    %cst_17 = arith.constant 1.000000e+00 : f32
    %36 = vector.broadcast %cst_17 : f32 to vector<8x128xf32>
    %37 = arith.addf %36, %35 : vector<8x128xf32>
    %38 = arith.divf %36, %37 : vector<8x128xf32>
    %c0_18 = arith.constant 0 : index
    %c0_19 = arith.constant 0 : index
    %39 = vector.load %arg8[%c0_18, %c0_19] : memref<8x128xf32, #tpu.memory_space<vmem>>, vector<8x128xf32>
    tpu.vector_store %arg8[%c0_18, %c0_19], %38 {strides = array<i32>} : memref<8x128xf32, #tpu.memory_space<vmem>>, vector<8x128xf32>,
    return
  }
  func.func @transform_0(%arg0: i32) -> (i32, i32) {
    %c0_i32 = arith.constant 0 : i32
    %c0_i32_0 = arith.constant 0 : i32
    return %arg0, %c0_i32 : i32, i32
  }
  func.func @transform_1(%arg0: i32) -> (i32, i32) {
    %c0_i32 = arith.constant 0 : i32
    %c0_i32_0 = arith.constant 0 : i32
    %c0_i32_1 = arith.constant 0 : i32
    return %c0_i32, %c0_i32_0 : i32, i32
  }
  func.func @transform_2(%arg0: i32) -> (i32, i32) {
    %c0_i32 = arith.constant 0 : i32
    %c0_i32_0 = arith.constant 0 : i32
    %c0_i32_1 = arith.constant 0 : i32
    return %c0_i32, %c0_i32_0 : i32, i32
  }
  func.func @transform_3(%arg0: i32) -> (i32, i32) {
    %c0_i32 = arith.constant 0 : i32
    %c0_i32_0 = arith.constant 0 : i32
    %c0_i32_1 = arith.constant 0 : i32
    return %c0_i32, %c0_i32_0 : i32, i32
  }
  func.func @transform_4(%arg0: i32) -> (i32, i32) {
    %c0_i32 = arith.constant 0 : i32
    %c0_i32_0 = arith.constant 0 : i32
    %c0_i32_1 = arith.constant 0 : i32
    return %c0_i32, %c0_i32_0 : i32, i32
  }
  func.func @transform_5(%arg0: i32) -> (i32, i32) {
    %c0_i32 = arith.constant 0 : i32
    %c0_i32_0 = arith.constant 0 : i32
    %c0_i32_1 = arith.constant 0 : i32
    return %c0_i32, %c0_i32_0 : i32, i32
  }
  func.func @transform_6(%arg0: i32) -> (i32, i32) {
    %c0_i32 = arith.constant 0 : i32
    %c0_i32_0 = arith.constant 0 : i32
    %c0_i32_1 = arith.constant 0 : i32
    return %c0_i32, %c0_i32_0 : i32, i32
  }
  func.func @transform_7(%arg0: i32) -> (i32, i32) {
    %c0_i32 = arith.constant 0 : i32
    %c0_i32_0 = arith.constant 0 : i32
    return %arg0, %c0_i32 : i32, i32
  }
}

</mosaic_0001>

<llo_original>
// kernel: mlp_forward.1
$region0: #{mlp_forward.1}
  #allocation0 [shape = 'u32[]', space=smem, size = 0x4, offset = 0x4, fixed_abs, tag = 'smem constant byte address 0x4 - core index']
  #allocation1 [shape = 'u32[144,128]{1,0:T(1,128)}', space=vmem, size = 0x12000, scoped, tag = 'internal scratch']
  %s0 = inlined_call_operand.vmem [shape: f32[8,128], index: 0, kind: input, shape index: {}]
  %s1 = inlined_call_operand.vmem [shape: f32[128,128], index: 1, kind: input, shape index: {}]
  %s2 = inlined_call_operand.vmem [shape: f32[8,128], index: 2, kind: input, shape index: {}]
  %s3 = inlined_call_operand.vmem [shape: f32[128,128], index: 3, kind: input, shape index: {}]
  %s4 = inlined_call_operand.vmem [shape: f32[8,128], index: 4, kind: input, shape index: {}]
  %s5 = inlined_call_operand.vmem [shape: f32[128,128], index: 5, kind: input, shape index: {}]
  %s6 = inlined_call_operand.vmem [shape: f32[1,128], index: 6, kind: input, shape index: {}]
  %s7 = inlined_call_operand.vmem [shape: f32[8,128], index: 7, kind: output, shape index: {}]
  %s8 = sld [smem:[#allocation0]]
  $region38: #{mlp_forward.1} parent=0
    _
  %s10 = ssub.s32 1, %s8
  %s11 = scalar_select 0, %s10, %s8
  // Predicated region
  $region2: #{mlp_forward.1} parent=0 // pred_check
    _
  $region3: #{mlp_forward.1} parent=0 // pred_check_branch
    %13 = sbr.rel (0) target = $region5
  $region4: #{mlp_forward.1} parent=0 // pred_region
    _
  $region5: #{mlp_forward.1} parent=0 // pred_fallthru
    _
  // Predicated region
  $region6: #{mlp_forward.1} parent=0 // pred_check
    _
  $region7: #{mlp_forward.1} parent=0 // pred_check_branch
    %15 = sbr.rel (0) target = $region9
  $region8: #{mlp_forward.1} parent=0 // pred_region
    _
  $region9: #{mlp_forward.1} parent=0 // pred_fallthru
    _
  // Predicated region
  $region10: #{mlp_forward.1} parent=0 // pred_check
    _
  $region11: #{mlp_forward.1} parent=0 // pred_check_branch
    %17 = sbr.rel (0) target = $region13
  $region12: #{mlp_forward.1} parent=0 // pred_region
    _
  $region13: #{mlp_forward.1} parent=0 // pred_fallthru
    _
  // Predicated region
  $region14: #{mlp_forward.1} parent=0 // pred_check
    _
  $region15: #{mlp_forward.1} parent=0 // pred_check_branch
    %19 = sbr.rel (0) target = $region17
  $region16: #{mlp_forward.1} parent=0 // pred_region
    _
  $region17: #{mlp_forward.1} parent=0 // pred_fallthru
    _
  // Predicated region
  $region18: #{mlp_forward.1} parent=0 // pred_check
    _
  $region19: #{mlp_forward.1} parent=0 // pred_check_branch
    %21 = sbr.rel (0) target = $region21
  $region20: #{mlp_forward.1} parent=0 // pred_region
    _
  $region21: #{mlp_forward.1} parent=0 // pred_fallthru
    _
  // Predicated region
  $region22: #{mlp_forward.1} parent=0 // pred_check
    _
  $region23: #{mlp_forward.1} parent=0 // pred_check_branch
    %23 = sbr.rel (0) target = $region25
  $region24: #{mlp_forward.1} parent=0 // pred_region
    _
  $region25: #{mlp_forward.1} parent=0 // pred_fallthru
    _
  // Predicated region
  $region26: #{mlp_forward.1} parent=0 // pred_check
    _
  $region27: #{mlp_forward.1} parent=0 // pred_check_branch
    %25 = sbr.rel (0) target = $region29
  $region28: #{mlp_forward.1} parent=0 // pred_region
    _
  $region29: #{mlp_forward.1} parent=0 // pred_fallthru
    _
  %v26 = vld [vmem:[%s0] sm:$0xff]
  %v27 = vld [vmem:[%s2] sm:$0xff]
  %v28 = vld [vmem:[%s1] sm:$0xff]
  %v29 = vld [vmem:[%s1 + $0x8] sm:$0xff]
  %v30 = vld [vmem:[%s1 + $0x10] sm:$0xff]
  %v31 = vld [vmem:[%s1 + $0x18] sm:$0xff]
  %v32 = vld [vmem:[%s1 + $0x20] sm:$0xff]
  %v33 = vld [vmem:[%s1 + $0x28] sm:$0xff]
  %v34 = vld [vmem:[%s1 + $0x30] sm:$0xff]
  %v35 = vld [vmem:[%s1 + $0x38] sm:$0xff]
  %v36 = vld [vmem:[%s1 + $0x40] sm:$0xff]
  %v37 = vld [vmem:[%s1 + $0x48] sm:$0xff]
  %v38 = vld [vmem:[%s1 + $0x50] sm:$0xff]
  %v39 = vld [vmem:[%s1 + $0x58] sm:$0xff]
  %v40 = vld [vmem:[%s1 + $0x60] sm:$0xff]
  %v41 = vld [vmem:[%s1 + $0x68] sm:$0xff]
  %v42 = vld [vmem:[%s1 + $0x70] sm:$0xff]
  %v43 = vld [vmem:[%s1 + $0x78] sm:$0xff]
  %v44 = vlaneseq
  %v45 = vshrl.u32 %v44, 7
  %v46 = vsub.s32 0, %v45
  %v47 = vrot.slane %v27, %v46
  %48 = vmatprep.subr.mxu0 0.0
  %49 = vmatpush1.msra.mxu0 %v43
  %50 = vmatprep.subr.mxu0 0.0
  %51 = vmatpush1.msra.mxu0 %v42
  %52 = vmatprep.subr.mxu0 0.0
  %53 = vmatpush1.msra.mxu0 %v41
  %54 = vmatprep.subr.mxu0 0.0
  %55 = vmatpush1.msra.mxu0 %v40
  %56 = vmatprep.subr.mxu0 0.0
  %57 = vmatpush1.msra.mxu0 %v39
  %58 = vmatprep.subr.mxu0 0.0
  %59 = vmatpush1.msra.mxu0 %v38
  %60 = vmatprep.subr.mxu0 0.0
  %61 = vmatpush1.msra.mxu0 %v37
  %62 = vmatprep.subr.mxu0 0.0
  %63 = vmatpush1.msra.mxu0 %v36
  %64 = vmatprep.subr.mxu0 0.0
  %65 = vmatpush1.msra.mxu0 %v35
  %66 = vmatprep.subr.mxu0 0.0
  %67 = vmatpush1.msra.mxu0 %v34
  %68 = vmatprep.subr.mxu0 0.0
  %69 = vmatpush1.msra.mxu0 %v33
  %70 = vmatprep.subr.mxu0 0.0
  %71 = vmatpush1.msra.mxu0 %v32
  %72 = vmatprep.subr.mxu0 0.0
  %73 = vmatpush1.msra.mxu0 %v31
  %74 = vmatprep.subr.mxu0 0.0
  %75 = vmatpush1.msra.mxu0 %v30
  %76 = vmatprep.subr.mxu0 0.0
  %77 = vmatpush1.msra.mxu0 %v29
  %78 = vmatprep.subr.mxu0 0.0
  %79 = vmatpush1.msra.mxu0 %v28
  %80 = vmatprep.subr.mxu0 0.0
  %81 = vmatpush2.msra.mxu0 0.0
  %82 = vmatprep.subr.mxu0 0.0
  %83 = vmatpush2.msra.mxu0 0.0
  %84 = vmatprep.subr.mxu0 0.0
  %85 = vmatpush2.msra.mxu0 0.0
  %86 = vmatprep.subr.mxu0 0.0
  %87 = vmatpush2.msra.mxu0 0.0
  %88 = vmatprep.subr.mxu0 0.0
  %89 = vmatpush2.msra.mxu0 0.0
  %90 = vmatprep.subr.mxu0 0.0
  %91 = vmatpush2.msra.mxu0 0.0
  %92 = vmatprep.subr.mxu0 0.0
  %93 = vmatpush2.msra.mxu0 0.0
  %94 = vmatprep.subr.mxu0 0.0
  %95 = vmatpush2.msra.mxu0 0.0
  %96 = vmatprep.subr.mxu0 0.0
  %97 = vmatpush2.msra.mxu0 0.0
  %98 = vmatprep.subr.mxu0 0.0
  %99 = vmatpush2.msra.mxu0 0.0
  %100 = vmatprep.subr.mxu0 0.0
  %101 = vmatpush2.msra.mxu0 0.0
  %102 = vmatprep.subr.mxu0 0.0
  %103 = vmatpush2.msra.mxu0 0.0
  %104 = vmatprep.subr.mxu0 0.0
  %105 = vmatpush2.msra.mxu0 0.0
  %106 = vmatprep.subr.mxu0 0.0
  %107 = vmatpush2.msra.mxu0 0.0
  %108 = vmatprep.subr.mxu0 0.0
  %109 = vmatpush2.msra.mxu0 0.0
  %110 = vmatprep.subr.mxu0 0.0
  %111 = vmatpush2.msra.mxu0 0.0
  %112 = vmatprep.mubr.f32.mxu0 0.0
  %113 = vmatmul.mubr.f32.gmra.mxu0 %v26
  %v114 = vpop.f32.mrf.mxu0
  %v115 = vadd.f32 %v47, %v114
  %v116 = vpop.f32.mrf.mxu0
  %117 = vdwg.mxu0
  %v118 = vmax.f32 %v115, 0.0
  %v119 = vlaneseq
  %v120 = vshrl.u32 %v119, 7
  %v121 = vsub.s32 1, %v120
  %v122 = vrot.slane %v27, %v121
  %v123 = vmul.f32 %v118, %v122
  %v124 = vlaneseq
  %v125 = vshrl.u32 %v124, 7
  %v126 = vsub.s32 2, %v125
  %v127 = vrot.slane %v27, %v126
  %v128 = vadd.f32 %v123, %v127
  %v129 = vld [vmem:[%s4] sm:$0xff]
  %v130 = vld [vmem:[%s3] sm:$0xff]
  %v131 = vld [vmem:[%s3 + $0x8] sm:$0xff]
  %v132 = vld [vmem:[%s3 + $0x10] sm:$0xff]
  %v133 = vld [vmem:[%s3 + $0x18] sm:$0xff]
  %v134 = vld [vmem:[%s3 + $0x20] sm:$0xff]
  %v135 = vld [vmem:[%s3 + $0x28] sm:$0xff]
  %v136 = vld [vmem:[%s3 + $0x30] sm:$0xff]
  %v137 = vld [vmem:[%s3 + $0x38] sm:$0xff]
  %v138 = vld [vmem:[%s3 + $0x40] sm:$0xff]
  %v139 = vld [vmem:[%s3 + $0x48] sm:$0xff]
  %v140 = vld [vmem:[%s3 + $0x50] sm:$0xff]
  %v141 = vld [vmem:[%s3 + $0x58] sm:$0xff]
  %v142 = vld [vmem:[%s3 + $0x60] sm:$0xff]
  %v143 = vld [vmem:[%s3 + $0x68] sm:$0xff]
  %v144 = vld [vmem:[%s3 + $0x70] sm:$0xff]
  %v145 = vld [vmem:[%s3 + $0x78] sm:$0xff]
  %v146 = vlaneseq
  %v147 = vshrl.u32 %v146, 7
  %v148 = vsub.s32 0, %v147
  %v149 = vrot.slane %v129, %v148
  %150 = vmatprep.subr.mxu0 0.0
  %151 = vmatpush1.msra.mxu0 %v145
  %152 = vmatprep.subr.mxu0 0.0
  %153 = vmatpush1.msra.mxu0 %v144
  %154 = vmatprep.subr.mxu0 0.0
  %155 = vmatpush1.msra.mxu0 %v143
  %156 = vmatprep.subr.mxu0 0.0
  %157 = vmatpush1.msra.mxu0 %v142
  %158 = vmatprep.subr.mxu0 0.0
  %159 = vmatpush1.msra.mxu0 %v141
  %160 = vmatprep.subr.mxu0 0.0
  %161 = vmatpush1.msra.mxu0 %v140
  %162 = vmatprep.subr.mxu0 0.0
  %163 = vmatpush1.msra.mxu0 %v139
  %164 = vmatprep.subr.mxu0 0.0
  %165 = vmatpush1.msra.mxu0 %v138
  %166 = vmatprep.subr.mxu0 0.0
  %167 = vmatpush1.msra.mxu0 %v137
  %168 = vmatprep.subr.mxu0 0.0
  %169 = vmatpush1.msra.mxu0 %v136
  %170 = vmatprep.subr.mxu0 0.0
  %171 = vmatpush1.msra.mxu0 %v135
  %172 = vmatprep.subr.mxu0 0.0
  %173 = vmatpush1.msra.mxu0 %v134
  %174 = vmatprep.subr.mxu0 0.0
  %175 = vmatpush1.msra.mxu0 %v133
  %176 = vmatprep.subr.mxu0 0.0
  %177 = vmatpush1.msra.mxu0 %v132
  %178 = vmatprep.subr.mxu0 0.0
  %179 = vmatpush1.msra.mxu0 %v131
  %180 = vmatprep.subr.mxu0 0.0
  %181 = vmatpush1.msra.mxu0 %v130
  %182 = vmatprep.subr.mxu0 0.0
  %183 = vmatpush2.msra.mxu0 0.0
  %184 = vmatprep.subr.mxu0 0.0
  %185 = vmatpush2.msra.mxu0 0.0
  %186 = vmatprep.subr.mxu0 0.0
  %187 = vmatpush2.msra.mxu0 0.0
  %188 = vmatprep.subr.mxu0 0.0
  %189 = vmatpush2.msra.mxu0 0.0
  %190 = vmatprep.subr.mxu0 0.0
  %191 = vmatpush2.msra.mxu0 0.0
  %192 = vmatprep.subr.mxu0 0.0
  %193 = vmatpush2.msra.mxu0 0.0
  %194 = vmatprep.subr.mxu0 0.0
  %195 = vmatpush2.msra.mxu0 0.0
  %196 = vmatprep.subr.mxu0 0.0
  %197 = vmatpush2.msra.mxu0 0.0
  %198 = vmatprep.subr.mxu0 0.0
  %199 = vmatpush2.msra.mxu0 0.0
  %200 = vmatprep.subr.mxu0 0.0
  %201 = vmatpush2.msra.mxu0 0.0
  %202 = vmatprep.subr.mxu0 0.0
  %203 = vmatpush2.msra.mxu0 0.0
  %204 = vmatprep.subr.mxu0 0.0
  %205 = vmatpush2.msra.mxu0 0.0
  %206 = vmatprep.subr.mxu0 0.0
  %207 = vmatpush2.msra.mxu0 0.0
  %208 = vmatprep.subr.mxu0 0.0
  %209 = vmatpush2.msra.mxu0 0.0
  %210 = vmatprep.subr.mxu0 0.0
  %211 = vmatpush2.msra.mxu0 0.0
  %212 = vmatprep.subr.mxu0 0.0
  %213 = vmatpush2.msra.mxu0 0.0
  %214 = vmatprep.mubr.f32.mxu0 0.0
  %215 = vmatmul.mubr.f32.gmra.mxu0 %v128
  %v216 = vpop.f32.mrf.mxu0
  %v217 = vadd.f32 %v149, %v216
  %v218 = vpop.f32.mrf.mxu0
  %219 = vdwg.mxu0
  %v220 = vmax.f32 %v217, 0.0
  %v221 = vlaneseq
  %v222 = vshrl.u32 %v221, 7
  %v223 = vsub.s32 1, %v222
  %v224 = vrot.slane %v129, %v223
  %v225 = vmul.f32 %v220, %v224
  %v226 = vlaneseq
  %v227 = vshrl.u32 %v226, 7
  %v228 = vsub.s32 2, %v227
  %v229 = vrot.slane %v129, %v228
  %v230 = vadd.f32 %v225, %v229
  %v231 = vld [vmem:[%s5] sm:$0xff]
  %v232 = vld [vmem:[%s5 + $0x8] sm:$0xff]
  %v233 = vld [vmem:[%s5 + $0x10] sm:$0xff]
  %v234 = vld [vmem:[%s5 + $0x18] sm:$0xff]
  %v235 = vld [vmem:[%s5 + $0x20] sm:$0xff]
  %v236 = vld [vmem:[%s5 + $0x28] sm:$0xff]
  %v237 = vld [vmem:[%s5 + $0x30] sm:$0xff]
  %v238 = vld [vmem:[%s5 + $0x38] sm:$0xff]
  %v239 = vld [vmem:[%s5 + $0x40] sm:$0xff]
  %v240 = vld [vmem:[%s5 + $0x48] sm:$0xff]
  %v241 = vld [vmem:[%s5 + $0x50] sm:$0xff]
  %v242 = vld [vmem:[%s5 + $0x58] sm:$0xff]
  %v243 = vld [vmem:[%s5 + $0x60] sm:$0xff]
  %v244 = vld [vmem:[%s5 + $0x68] sm:$0xff]
  %v245 = vld [vmem:[%s5 + $0x70] sm:$0xff]
  %v246 = vld [vmem:[%s5 + $0x78] sm:$0xff]
  %v247 = vld [vmem:[%s6] sm:$0x1]
  %v249 = vlaneseq
  %v250 = vshrl.u32 %v249, 7
  %v251 = vsub.s32 0, %v250
  %v252 = vrot.slane %v247, %v251
  %254 = vmatprep.subr.mxu0 0.0
  %255 = vmatpush1.msra.mxu0 %v246
  %256 = vmatprep.subr.mxu0 0.0
  %257 = vmatpush1.msra.mxu0 %v245
  %258 = vmatprep.subr.mxu0 0.0
  %259 = vmatpush1.msra.mxu0 %v244
  %260 = vmatprep.subr.mxu0 0.0
  %261 = vmatpush1.msra.mxu0 %v243
  %262 = vmatprep.subr.mxu0 0.0
  %263 = vmatpush1.msra.mxu0 %v242
  %264 = vmatprep.subr.mxu0 0.0
  %265 = vmatpush1.msra.mxu0 %v241
  %266 = vmatprep.subr.mxu0 0.0
  %267 = vmatpush1.msra.mxu0 %v240
  %268 = vmatprep.subr.mxu0 0.0
  %269 = vmatpush1.msra.mxu0 %v239
  %270 = vmatprep.subr.mxu0 0.0
  %271 = vmatpush1.msra.mxu0 %v238
  %272 = vmatprep.subr.mxu0 0.0
  %273 = vmatpush1.msra.mxu0 %v237
  %274 = vmatprep.subr.mxu0 0.0
  %275 = vmatpush1.msra.mxu0 %v236
  %276 = vmatprep.subr.mxu0 0.0
  %277 = vmatpush1.msra.mxu0 %v235
  %278 = vmatprep.subr.mxu0 0.0
  %279 = vmatpush1.msra.mxu0 %v234
  %280 = vmatprep.subr.mxu0 0.0
  %281 = vmatpush1.msra.mxu0 %v233
  %282 = vmatprep.subr.mxu0 0.0
  %283 = vmatpush1.msra.mxu0 %v232
  %284 = vmatprep.subr.mxu0 0.0
  %285 = vmatpush1.msra.mxu0 %v231
  %286 = vmatprep.subr.mxu0 0.0
  %287 = vmatpush2.msra.mxu0 0.0
  %288 = vmatprep.subr.mxu0 0.0
  %289 = vmatpush2.msra.mxu0 0.0
  %290 = vmatprep.subr.mxu0 0.0
  %291 = vmatpush2.msra.mxu0 0.0
  %292 = vmatprep.subr.mxu0 0.0
  %293 = vmatpush2.msra.mxu0 0.0
  %294 = vmatprep.subr.mxu0 0.0
  %295 = vmatpush2.msra.mxu0 0.0
  %296 = vmatprep.subr.mxu0 0.0
  %297 = vmatpush2.msra.mxu0 0.0
  %298 = vmatprep.subr.mxu0 0.0
  %299 = vmatpush2.msra.mxu0 0.0
  %300 = vmatprep.subr.mxu0 0.0
  %301 = vmatpush2.msra.mxu0 0.0
  %302 = vmatprep.subr.mxu0 0.0
  %303 = vmatpush2.msra.mxu0 0.0
  %304 = vmatprep.subr.mxu0 0.0
  %305 = vmatpush2.msra.mxu0 0.0
  %306 = vmatprep.subr.mxu0 0.0
  %307 = vmatpush2.msra.mxu0 0.0
  %308 = vmatprep.subr.mxu0 0.0
  %309 = vmatpush2.msra.mxu0 0.0
  %310 = vmatprep.subr.mxu0 0.0
  %311 = vmatpush2.msra.mxu0 0.0
  %312 = vmatprep.subr.mxu0 0.0
  %313 = vmatpush2.msra.mxu0 0.0
  %314 = vmatprep.subr.mxu0 0.0
  %315 = vmatpush2.msra.mxu0 0.0
  %316 = vmatprep.subr.mxu0 0.0
  %317 = vmatpush2.msra.mxu0 0.0
  %318 = vmatprep.mubr.f32.mxu0 0.0
  %319 = vmatmul.mubr.f32.gmra.mxu0 %v230
  %v320 = vpop.f32.mrf.mxu0
  %v321 = vadd.f32 %v252, %v320
  %v322 = vpop.f32.mrf.mxu0
  %323 = vdwg.mxu0
  %v324 = vxor.u32 %v321, 2147483648
  %v325 = vmul.f32 %v324, 1.442695
  %v326 = vpow.pop %v325
  %v327 = vadd.f32 %v326, 1.0
  %v328 = vrcp.pop %v327
  %v329 = vmul.f32 1.0, %v328
  %330 = vst [vmem:[%s7] sm:$0xff] %v329
  // Predicated region
  $region30: #{mlp_forward.1} parent=0 // pred_check
    _
  $region31: #{mlp_forward.1} parent=0 // pred_check_branch
    %332 = sbr.rel (0) target = $region33
  $region32: #{mlp_forward.1} parent=0 // pred_region
    _
  $region33: #{mlp_forward.1} parent=0 // pred_fallthru
    _
  // Predicated region
  $region34: #{mlp_forward.1} parent=0 // pred_check
    _
  $region35: #{mlp_forward.1} parent=0 // pred_check_branch
    %334 = sbr.rel (0) target = $region37
  $region36: #{mlp_forward.1} parent=0 // pred_region
    _
  $region37: #{mlp_forward.1} parent=0 // pred_fallthru
    _

</llo_original>
